<compile_context>
chip_gen: v5e
topology: v5e:2x2
jax: 0.10.0
libtpu: 0.0.40
codegen_flags: <defaults>
</compile_context>

<pallas_src>
import functools
import math

import jax
import jax.numpy as jnp
import numpy as np
from jax.experimental import pallas as pl
from jax.experimental.pallas import tpu as pltpu

_S = 1.0 / math.sqrt(2.0)
# pywt filter banks (dec_lo, dec_hi); deterministic, defined in-script.
_WAVELETS = {
    "db1": ([_S, _S], [-_S, _S]),
    "haar": ([_S, _S], [-_S, _S]),
}

_VMEM_LIMIT_BYTES = 48 * 1024 * 1024       # < v7x 64 MiB physical; > scoped defaults
_BASE_BLOCK_BYTES = 2 * 1024 * 1024        # proven everywhere (v7x-safe)
_BIG_BLOCK_BYTES = 4 * 1024 * 1024         # used by the fused path on 128 MiB parts


def _dec_filter_2d(wave: str) -> np.ndarray:
    """Replicates _get_filters(flip=True) + _construct_2d_filter -> (4, L, L)."""
    if wave not in _WAVELETS:
        # TODO(synk): only db1/haar coefficients are embedded in-script.
        raise NotImplementedError(f"wavelet {wave!r} not supported")
    dec_lo, dec_hi = _WAVELETS[wave]
    lo = np.asarray(dec_lo, np.float64)[::-1]   # flip=True
    hi = np.asarray(dec_hi, np.float64)[::-1]
    ll = np.outer(lo, lo)
    lh = np.outer(hi, lo)
    hl = np.outer(lo, hi)
    hh = np.outer(hi, hi)
    return np.stack([ll, lh, hl, hh], axis=0)   # ordering (A, H, V, D)


# --------------------------------------------------------------------------
# Small helpers (tiling / budgets)
# --------------------------------------------------------------------------

@functools.lru_cache(maxsize=None)
def _fused_target_block_bytes() -> int:
    """Generation-aware per-stream block target for the fused path."""
    try:
        cap = int(pltpu.get_tpu_info().vmem_capacity_bytes)
    except Exception:
        cap = None
    if cap is not None and cap >= 100 * 1024 * 1024:     # v5e / v6e (128 MiB VMEM)
        return _BIG_BLOCK_BYTES
    return _BASE_BLOCK_BYTES                             # v7x-safe default


def _sublane_mult(dtype) -> int:
    """Minimum second-to-last block multiple: 8 (f32), 16 (bf16), 32 (int8)."""
    return max(8, 32 // jnp.dtype(dtype).itemsize)


def _pick_block_rows(rows: int, row_bytes: int, sub: int, target_bytes: int) -> int:
    """Block height: ~target_bytes per stream, multiple of `sub`.

    An exact divisor of `rows` is only taken if it is not much smaller than
    the target (>= half of it, or >= 256 rows); otherwise the large block is
    kept and the ragged tail block is masked by Pallas.
    """
    if rows <= sub:
        return rows
    th = min(rows, max(1, target_bytes // max(1, row_bytes)))
    if th >= rows:
        return rows
    th = max(sub, (th // sub) * sub)
    for cand in range(th, sub - 1, -sub):
        if rows % cand == 0:
            if cand * 2 >= th or cand >= 256:
                return cand
            break          # largest divisor is too small -> keep th, eat the tail
    return th


def _prepad(x):
    """ptwt-style zero padding for db1 (a no-op for even H, W)."""
    B, C, H, W = x.shape
    padr, padb = W % 2, H % 2            # base pad (2L-3)//2 == 0 for L == 2
    if padr or padb:
        x = jnp.pad(x, ((0, 0), (0, 0), (0, padb), (0, padr)))
    return x, H + padb, W + padr


# --------------------------------------------------------------------------
# Kernels
# --------------------------------------------------------------------------

def _haar_butterfly(x00, x01, x10, x11, a_ref, h_ref, v_ref, d_ref):
    """db1/Haar 2x2 butterfly.  With x00=x[2i,2j], x01=x[2i,2j+1], ...:
        A = .5*(x00+x01+x10+x11)   H = .5*(x00+x01-x10-x11)
        V = .5*(x00-x01+x10-x11)   D = .5*(x00-x01-x10+x11)
    0.5 == (1/sqrt(2))**2 in f32, identical to the conv filter taps.
    """
    f32 = jnp.float32
    p = x00.astype(f32) + x01.astype(f32)
    r = x00.astype(f32) - x01.astype(f32)
    q = x10.astype(f32) + x11.astype(f32)
    t = x10.astype(f32) - x11.astype(f32)
    a_ref[...] = ((p + q) * 0.5).astype(a_ref.dtype)
    h_ref[...] = ((p - q) * 0.5).astype(h_ref.dtype)
    v_ref[...] = ((r + t) * 0.5).astype(v_ref.dtype)
    d_ref[...] = ((r - t) * 0.5).astype(d_ref.dtype)


def _planes_kernel(x00_ref, x01_ref, x10_ref, x11_ref, a_ref, h_ref, v_ref, d_ref):
    """Fallback kernel: the 4 stride-2 planes were materialised by XLA."""
    _haar_butterfly(x00_ref[...], x01_ref[...], x10_ref[...], x11_ref[...],
                    a_ref, h_ref, v_ref, d_ref)


def _fused_kernel_vslice(x_ref, a_ref, h_ref, v_ref, d_ref):
    """Fused kernel: de-interleave rows/columns with value-level strided slices."""
    x = x_ref[...]                      # (2*TH, Wp): rows/cols still interleaved
    _haar_butterfly(x[0::2, 0::2], x[0::2, 1::2], x[1::2, 0::2], x[1::2, 1::2],
                    a_ref, h_ref, v_ref, d_ref)


def _fused_kernel_rslice(x_ref, a_ref, h_ref, v_ref, d_ref):
    """Fused kernel: de-interleave with strided pl.ds loads on the input ref."""
    th, wo = a_ref.shape
    _haar_butterfly(
        x_ref[pl.ds(0, th, 2), pl.ds(0, wo, 2)],
        x_ref[pl.ds(0, th, 2), pl.ds(1, wo, 2)],
        x_ref[pl.ds(1, th, 2), pl.ds(0, wo, 2)],
        x_ref[pl.ds(1, th, 2), pl.ds(1, wo, 2)],
        a_ref, h_ref, v_ref, d_ref)


# --------------------------------------------------------------------------
# Implementations (each jitted; wave/mode already validated by the dispatcher)
# --------------------------------------------------------------------------

def _dwt2d_fused_impl(x, kernel):
    """Fused path: the kernel reads raw image rows and de-interleaves itself.

    HBM traffic: read x once + write the 4 sub-bands once (~2x input bytes).
    """
    B, C, H, W = x.shape
    x, Hp, Wp = _prepad(x)
    Ho, Wo = Hp // 2, Wp // 2
    rows_out = B * C * Ho
    itemsize = jnp.dtype(x.dtype).itemsize
    sub = _sublane_mult(x.dtype)

    # Zero-copy: consecutive image rows 2i / 2i+1 become consecutive rows here.
    x2 = x.reshape(rows_out * 2, Wp)

    th = _pick_block_rows(rows_out, 2 * Wp * itemsize, sub,
                          _fused_target_block_bytes())

    in_spec = pl.BlockSpec((2 * th, Wp), lambda i: (i, 0))
    out_spec = pl.BlockSpec((th, Wo), lambda i: (i, 0))
    out_sds = jax.ShapeDtypeStruct((rows_out, Wo), x.dtype)

    a, h, v, d = pl.pallas_call(
        kernel,
        out_shape=(out_sds,) * 4,
        grid=(pl.cdiv(rows_out, th),),
        in_specs=[in_spec],
        out_specs=(out_spec,) * 4,
        compiler_params=pltpu.CompilerParams(
            dimension_semantics=("parallel",),
            vmem_limit_bytes=_VMEM_LIMIT_BYTES,
        ),
    )(x2)

    rs = lambda y: y.reshape(B, C, Ho, Wo)
    return rs(a), rs(h), rs(v), rs(d)


def _dwt2d_planes_impl(x, allow_fusion):
    """Fallback path: XLA materialises the 4 stride-2 planes, the kernel is a
    pure lane-dense elementwise butterfly (known-good on all generations).

    With allow_fusion=True, XLA is allowed to fuse the stride-2 slicing
    producers into the pallas_call operands (review's lower-risk variant).
    """
    B, C, H, W = x.shape
    x, Hp, Wp = _prepad(x)
    Ho, Wo = Hp // 2, Wp // 2
    BC = B * C
    n = BC * Ho * Wo
    itemsize = jnp.dtype(x.dtype).itemsize
    sub = _sublane_mult(x.dtype)

    # Lane-dense flattening; pad the stream so the lane dim is a full multiple
    # of 128 (unmasked vst) when n has awkward factors.
    lane = None
    for cand in (512, 256, 128):
        if n % cand == 0:
            lane = cand
            break
    pad = 0
    if lane is None:
        lane = 512 if n >= 512 else 128
        pad = (-n) % lane
    rows = (n + pad) // lane

    xr = x.reshape(BC, Hp, Wp)

    def plane(ro, co):
        p = xr[:, ro::2, co::2].reshape(n)
        if pad:
            p = jnp.pad(p, (0, pad))
        return p.reshape(rows, lane)

    x00, x01, x10, x11 = plane(0, 0), plane(0, 1), plane(1, 0), plane(1, 1)

    th = _pick_block_rows(rows, lane * itemsize, sub, _BASE_BLOCK_BYTES)

    block = pl.BlockSpec((th, lane), lambda i: (i, 0))
    out_sds = jax.ShapeDtypeStruct((rows, lane), x.dtype)

    cp = dict(dimension_semantics=("parallel",),
              vmem_limit_bytes=_VMEM_LIMIT_BYTES)
    if allow_fusion:
        cp["allow_input_fusion"] = [True, True, True, True]

    a, h, v, d = pl.pallas_call(
        _planes_kernel,
        out_shape=(out_sds,) * 4,
        grid=(pl.cdiv(rows, th),),
        in_specs=[block] * 4,
        out_specs=(block,) * 4,
        compiler_params=pltpu.CompilerParams(**cp),
    )(x00, x01, x10, x11)

    def rs(y):
        y = y.reshape(rows * lane)
        if pad:
            y = y[:n]
        return y.reshape(B, C, Ho, Wo)
    return rs(a), rs(h), rs(v), rs(d)


_dwt2d_fused_vslice = jax.jit(
    functools.partial(_dwt2d_fused_impl, kernel=_fused_kernel_vslice))
_dwt2d_fused_rslice = jax.jit(
    functools.partial(_dwt2d_fused_impl, kernel=_fused_kernel_rslice))
_dwt2d_planes_fused = jax.jit(
    functools.partial(_dwt2d_planes_impl, allow_fusion=True))
_dwt2d_planes = jax.jit(
    functools.partial(_dwt2d_planes_impl, allow_fusion=False))

# Tried in order; the last entry is the known-good reference / terminal fallback.
_IMPL_CANDIDATES = (
    ("fused-value-slice", _dwt2d_fused_vslice),
    ("fused-ref-slice", _dwt2d_fused_rslice),
    ("planes-input-fusion", _dwt2d_planes_fused),
    ("planes", _dwt2d_planes),
)
_IMPL_CHOICE = {}       # (shape, dtype) -> candidate index


def _to_np_f32(outs):
    return tuple(np.asarray(y.astype(jnp.float32)) for y in outs)


def dwt2d(x, wave: str = "db1", mode: str = "zero"):
    """1-level 2D DWT.  x: (B, C, H, W) -> (A, H, V, D), each (B, C, H/2, W/2)."""
    assert x.ndim == 4
    if wave not in _WAVELETS:
        raise NotImplementedError(f"wavelet {wave!r} not supported")
    if mode != "zero":
        # TODO(synk): symmetric/reflect/periodic padding not implemented.
        raise NotImplementedError("only mode='zero' is implemented")

    key = (tuple(x.shape), jnp.dtype(x.dtype).name)
    idx = _IMPL_CHOICE.get(key)
    if idx is not None:
        return _IMPL_CANDIDATES[idx][1](x)

    # First call for this shape/dtype: pick the first candidate that both
    # lowers on this TPU generation and matches the known-good planes kernel.
    ref_idx = len(_IMPL_CANDIDATES) - 1
    ref_out = _IMPL_CANDIDATES[ref_idx][1](x)
    jax.block_until_ready(ref_out)
    ref_np = _to_np_f32(ref_out)
    tol = 1e-5 if jnp.dtype(x.dtype).itemsize >= 4 else 2e-2

    chosen, chosen_out = ref_idx, ref_out
    for i in range(ref_idx):
        fn = _IMPL_CANDIDATES[i][1]
        try:
            out = fn(x)
            jax.block_until_ready(out)
            got = _to_np_f32(out)
            ok = all(np.allclose(g, r, rtol=tol, atol=tol)
                     for g, r in zip(got, ref_np))
        except Exception:
            ok = False
        if ok:
            chosen, chosen_out = i, out
            break
    _IMPL_CHOICE[key] = chosen
    return chosen_out


class DWT2D:
    """Pallas equivalent of the PyTorch DWT2D module."""

    def __init__(self, wave: str = "db1", mode: str = "zero"):
        self.wave = wave
        self.mode = mode

    def __call__(self, x):
        x_a, x_h, x_v, x_d = dwt2d(x, self.wave, self.mode)
        return (x_a, x_h, x_v, x_d)


# --------------------------------------------------------------------------
# Independent reference + self-check
# --------------------------------------------------------------------------

def _reference_dwt2d(x, wave="db1"):
    """Independent reference using lax.conv (matches F.conv2d(stride=2))."""
    B, C, H, W = x.shape
    filt = jnp.asarray(_dec_filter_2d(wave)[:, None, :, :], x.dtype)  # (4,1,2,2)
    xr = x.reshape(B * C, 1, H, W)
    y = jax.lax.conv_general_dilated(
        xr, filt, window_strides=(2, 2), padding="VALID",
        dimension_numbers=("NCHW", "OIHW", "NCHW"))
    outs = [y[:, k].reshape(B, C, H // 2, W // 2) for k in range(4)]
    return tuple(outs)


def _check(x):
    outs = DWT2D(wave="db1", mode="zero")(x)
    jax.block_until_ready(outs)
    refs = _reference_dwt2d(x, "db1")
    B, C, H, W = x.shape
    for got, ref in zip(outs, refs):
        assert got.shape == (B, C, H // 2, W // 2), got.shape
        np.testing.assert_allclose(np.asarray(got), np.asarray(ref),
                                   rtol=1e-5, atol=1e-5)


if __name__ == "__main__":
    key = jax.random.PRNGKey(0)
    # Small shape implied by the module (B, C, H, W).
    _check(jax.random.normal(key, (2, 4, 16, 16), dtype=jnp.float32))
    # Larger shape: lane-dense (Wo=128) outputs, multi-grid-step pipelined path.
    _check(jax.random.normal(jax.random.PRNGKey(0), (4, 16, 256, 256),
                             dtype=jnp.float32))
    print("KERNEL_OK")
</pallas_src>

<mosaic_0001>
module attributes {stable_mosaic.version = 11 : i64} {
  func.func @_planes_kernel(%arg0: i32, %arg1: memref<1x512xf32, #tpu.memory_space<vmem>>, %arg2: memref<1x512xf32, #tpu.memory_space<vmem>>, %arg3: memref<1x512xf32, #tpu.memory_space<vmem>>, %arg4: memref<1x512xf32, #tpu.memory_space<vmem>>, %arg5: memref<1x512xf32, #tpu.memory_space<vmem>>, %arg6: memref<1x512xf32, #tpu.memory_space<vmem>>, %arg7: memref<1x512xf32, #tpu.memory_space<vmem>>, %arg8: memref<1x512xf32, #tpu.memory_space<vmem>>) attributes {dimension_semantics = [#tpu.dimension_semantics<parallel>], iteration_bounds = array<i64: 1>, scalar_prefetch = 0 : i64, scratch_operands = 0 : i64, tpu.core_type = #tpu.core_type<tc>, window_params = [{transform_indices = @transform_0, window_bounds = array<i64: 1, 512>}, {transform_indices = @transform_1, window_bounds = array<i64: 1, 512>}, {transform_indices = @transform_2, window_bounds = array<i64: 1, 512>}, {transform_indices = @transform_3, window_bounds = array<i64: 1, 512>}, {transform_indices = @transform_4, window_bounds = array<i64: 1, 512>}, {transform_indices = @transform_5, window_bounds = array<i64: 1, 512>}, {transform_indices = @transform_6, window_bounds = array<i64: 1, 512>}, {transform_indices = @transform_7, window_bounds = array<i64: 1, 512>}]} {
    %c0 = arith.constant 0 : index
    %c0_0 = arith.constant 0 : index
    %0 = vector.load %arg1[%c0, %c0_0] : memref<1x512xf32, #tpu.memory_space<vmem>>, vector<1x512xf32>
    %c0_1 = arith.constant 0 : index
    %c0_2 = arith.constant 0 : index
    %1 = vector.load %arg2[%c0_1, %c0_2] : memref<1x512xf32, #tpu.memory_space<vmem>>, vector<1x512xf32>
    %c0_3 = arith.constant 0 : index
    %c0_4 = arith.constant 0 : index
    %2 = vector.load %arg3[%c0_3, %c0_4] : memref<1x512xf32, #tpu.memory_space<vmem>>, vector<1x512xf32>
    %c0_5 = arith.constant 0 : index
    %c0_6 = arith.constant 0 : index
    %3 = vector.load %arg4[%c0_5, %c0_6] : memref<1x512xf32, #tpu.memory_space<vmem>>, vector<1x512xf32>
    %4 = arith.addf %0, %1 : vector<1x512xf32>
    %5 = arith.subf %0, %1 : vector<1x512xf32>
    %6 = arith.addf %2, %3 : vector<1x512xf32>
    %7 = arith.subf %2, %3 : vector<1x512xf32>
    %8 = arith.addf %4, %6 : vector<1x512xf32>
    %cst = arith.constant 5.000000e-01 : f32
    %9 = vector.broadcast %cst : f32 to vector<1x512xf32>
    %10 = arith.mulf %8, %9 : vector<1x512xf32>
    %c0_7 = arith.constant 0 : index
    %c0_8 = arith.constant 0 : index
    %11 = vector.load %arg5[%c0_7, %c0_8] : memref<1x512xf32, #tpu.memory_space<vmem>>, vector<1x512xf32>
    tpu.vector_store %arg5[%c0_7, %c0_8], %10 {strides = array<i32>} : memref<1x512xf32, #tpu.memory_space<vmem>>, vector<1x512xf32>,
    %12 = arith.subf %4, %6 : vector<1x512xf32>
    %cst_9 = arith.constant 5.000000e-01 : f32
    %13 = vector.broadcast %cst_9 : f32 to vector<1x512xf32>
    %14 = arith.mulf %12, %13 : vector<1x512xf32>
    %c0_10 = arith.constant 0 : index
    %c0_11 = arith.constant 0 : index
    %15 = vector.load %arg6[%c0_10, %c0_11] : memref<1x512xf32, #tpu.memory_space<vmem>>, vector<1x512xf32>
    tpu.vector_store %arg6[%c0_10, %c0_11], %14 {strides = array<i32>} : memref<1x512xf32, #tpu.memory_space<vmem>>, vector<1x512xf32>,
    %16 = arith.addf %5, %7 : vector<1x512xf32>
    %cst_12 = arith.constant 5.000000e-01 : f32
    %17 = vector.broadcast %cst_12 : f32 to vector<1x512xf32>
    %18 = arith.mulf %16, %17 : vector<1x512xf32>
    %c0_13 = arith.constant 0 : index
    %c0_14 = arith.constant 0 : index
    %19 = vector.load %arg7[%c0_13, %c0_14] : memref<1x512xf32, #tpu.memory_space<vmem>>, vector<1x512xf32>
    tpu.vector_store %arg7[%c0_13, %c0_14], %18 {strides = array<i32>} : memref<1x512xf32, #tpu.memory_space<vmem>>, vector<1x512xf32>,
    %20 = arith.subf %5, %7 : vector<1x512xf32>
    %cst_15 = arith.constant 5.000000e-01 : f32
    %21 = vector.broadcast %cst_15 : f32 to vector<1x512xf32>
    %22 = arith.mulf %20, %21 : vector<1x512xf32>
    %c0_16 = arith.constant 0 : index
    %c0_17 = arith.constant 0 : index
    %23 = vector.load %arg8[%c0_16, %c0_17] : memref<1x512xf32, #tpu.memory_space<vmem>>, vector<1x512xf32>
    tpu.vector_store %arg8[%c0_16, %c0_17], %22 {strides = array<i32>} : memref<1x512xf32, #tpu.memory_space<vmem>>, vector<1x512xf32>,
    return
  }
  func.func @transform_0(%arg0: i32) -> (i32, i32) {
    %c0_i32 = arith.constant 0 : i32
    %c0_i32_0 = arith.constant 0 : i32
    return %arg0, %c0_i32 : i32, i32
  }
  func.func @transform_1(%arg0: i32) -> (i32, i32) {
    %c0_i32 = arith.constant 0 : i32
    %c0_i32_0 = arith.constant 0 : i32
    return %arg0, %c0_i32 : i32, i32
  }
  func.func @transform_2(%arg0: i32) -> (i32, i32) {
    %c0_i32 = arith.constant 0 : i32
    %c0_i32_0 = arith.constant 0 : i32
    return %arg0, %c0_i32 : i32, i32
  }
  func.func @transform_3(%arg0: i32) -> (i32, i32) {
    %c0_i32 = arith.constant 0 : i32
    %c0_i32_0 = arith.constant 0 : i32
    return %arg0, %c0_i32 : i32, i32
  }
  func.func @transform_4(%arg0: i32) -> (i32, i32) {
    %c0_i32 = arith.constant 0 : i32
    %c0_i32_0 = arith.constant 0 : i32
    return %arg0, %c0_i32 : i32, i32
  }
  func.func @transform_5(%arg0: i32) -> (i32, i32) {
    %c0_i32 = arith.constant 0 : i32
    %c0_i32_0 = arith.constant 0 : i32
    return %arg0, %c0_i32 : i32, i32
  }
  func.func @transform_6(%arg0: i32) -> (i32, i32) {
    %c0_i32 = arith.constant 0 : i32
    %c0_i32_0 = arith.constant 0 : i32
    return %arg0, %c0_i32 : i32, i32
  }
  func.func @transform_7(%arg0: i32) -> (i32, i32) {
    %c0_i32 = arith.constant 0 : i32
    %c0_i32_0 = arith.constant 0 : i32
    return %arg0, %c0_i32 : i32, i32
  }
}

</mosaic_0001>

<llo_original>
// kernel: _dwt2d_planes_impl.1
$region0: #{_dwt2d_planes_impl.1}
  #allocation0 [shape = 'u32[]', space=smem, size = 0x4, offset = 0x4, fixed_abs, tag = 'smem constant byte address 0x4 - core index']
  #allocation1 [shape = 'u32[72,128]{1,0:T(1,128)}', space=vmem, size = 0x9000, scoped, tag = 'internal scratch']
  %s0 = inlined_call_operand.vmem [shape: f32[1,512], index: 0, kind: input, shape index: {}]
  %s1 = inlined_call_operand.vmem [shape: f32[1,512], index: 1, kind: input, shape index: {}]
  %s2 = inlined_call_operand.vmem [shape: f32[1,512], index: 2, kind: input, shape index: {}]
  %s3 = inlined_call_operand.vmem [shape: f32[1,512], index: 3, kind: input, shape index: {}]
  %s4 = inlined_call_operand.vmem [shape: f32[1,512], index: 4, kind: output, shape index: {0}]
  %s5 = inlined_call_operand.vmem [shape: f32[1,512], index: 5, kind: output, shape index: {1}]
  %s6 = inlined_call_operand.vmem [shape: f32[1,512], index: 6, kind: output, shape index: {2}]
  %s7 = inlined_call_operand.vmem [shape: f32[1,512], index: 7, kind: output, shape index: {3}]
  %8 = xla_tuple %s4, %s5, %s6, %s7
  %s9 = sld [smem:[#allocation0]]
  $region50: #{_dwt2d_planes_impl.1} parent=0
    _
  %s11 = ssub.s32 1, %s9
  %s12 = scalar_select 0, %s11, %s9
  // Predicated region
  $region2: #{_dwt2d_planes_impl.1} parent=0 // pred_check
    _
  $region3: #{_dwt2d_planes_impl.1} parent=0 // pred_check_branch
    %14 = sbr.rel (0) target = $region5
  $region4: #{_dwt2d_planes_impl.1} parent=0 // pred_region
    _
  $region5: #{_dwt2d_planes_impl.1} parent=0 // pred_fallthru
    _
  // Predicated region
  $region6: #{_dwt2d_planes_impl.1} parent=0 // pred_check
    _
  $region7: #{_dwt2d_planes_impl.1} parent=0 // pred_check_branch
    %16 = sbr.rel (0) target = $region9
  $region8: #{_dwt2d_planes_impl.1} parent=0 // pred_region
    _
  $region9: #{_dwt2d_planes_impl.1} parent=0 // pred_fallthru
    _
  // Predicated region
  $region10: #{_dwt2d_planes_impl.1} parent=0 // pred_check
    _
  $region11: #{_dwt2d_planes_impl.1} parent=0 // pred_check_branch
    %18 = sbr.rel (0) target = $region13
  $region12: #{_dwt2d_planes_impl.1} parent=0 // pred_region
    _
  $region13: #{_dwt2d_planes_impl.1} parent=0 // pred_fallthru
    _
  // Predicated region
  $region14: #{_dwt2d_planes_impl.1} parent=0 // pred_check
    _
  $region15: #{_dwt2d_planes_impl.1} parent=0 // pred_check_branch
    %20 = sbr.rel (0) target = $region17
  $region16: #{_dwt2d_planes_impl.1} parent=0 // pred_region
    _
  $region17: #{_dwt2d_planes_impl.1} parent=0 // pred_fallthru
    _
  %v21 = vld [vmem:[%s0] sm:$0xf]
  %v22 = vld [vmem:[%s1] sm:$0xf]
  %v23 = vld [vmem:[%s2] sm:$0xf]
  %v24 = vld [vmem:[%s3] sm:$0xf]
  %v25 = vadd.f32 %v21, %v22
  %v26 = vsub.f32 %v21, %v22
  %v27 = vadd.f32 %v23, %v24
  %v28 = vsub.f32 %v23, %v24
  %v29 = vadd.f32 %v25, %v27
  %v30 = vmul.f32 %v29, 0.5
  %v31 = vlaneseq
  %vm32 = vcmp.ge.s32.totalorder %v31, 0
  %vm33 = vcmp.lt.s32.totalorder %v31, 512
  %vm34 = vmand %vm32, %vm33
  %35 = vst.msk [vmem:[%s4] sm:$0xf] %vm34, %v30
  %v36 = vsub.f32 %v25, %v27
  %v37 = vmul.f32 %v36, 0.5
  %38 = vst.msk [vmem:[%s5] sm:$0xf] %vm34, %v37
  %v39 = vadd.f32 %v26, %v28
  %v40 = vmul.f32 %v39, 0.5
  %41 = vst.msk [vmem:[%s6] sm:$0xf] %vm34, %v40
  %v42 = vsub.f32 %v26, %v28
  %v43 = vmul.f32 %v42, 0.5
  %44 = vst.msk [vmem:[%s7] sm:$0xf] %vm34, %v43
  // Predicated region
  $region18: #{_dwt2d_planes_impl.1} parent=0 // pred_check
    _
  $region19: #{_dwt2d_planes_impl.1} parent=0 // pred_check_branch
    %46 = sbr.rel (0) target = $region21
  $region20: #{_dwt2d_planes_impl.1} parent=0 // pred_region
    _
  $region21: #{_dwt2d_planes_impl.1} parent=0 // pred_fallthru
    _
  // Predicated region
  $region22: #{_dwt2d_planes_impl.1} parent=0 // pred_check
    _
  $region23: #{_dwt2d_planes_impl.1} parent=0 // pred_check_branch
    %48 = sbr.rel (0) target = $region25
  $region24: #{_dwt2d_planes_impl.1} parent=0 // pred_region
    _
  $region25: #{_dwt2d_planes_impl.1} parent=0 // pred_fallthru
    _
  // Predicated region
  $region26: #{_dwt2d_planes_impl.1} parent=0 // pred_check
    _
  $region27: #{_dwt2d_planes_impl.1} parent=0 // pred_check_branch
    %50 = sbr.rel (0) target = $region29
  $region28: #{_dwt2d_planes_impl.1} parent=0 // pred_region
    _
  $region29: #{_dwt2d_planes_impl.1} parent=0 // pred_fallthru
    _
  // Predicated region
  $region30: #{_dwt2d_planes_impl.1} parent=0 // pred_check
    _
  $region31: #{_dwt2d_planes_impl.1} parent=0 // pred_check_branch
    %52 = sbr.rel (0) target = $region33
  $region32: #{_dwt2d_planes_impl.1} parent=0 // pred_region
    _
  $region33: #{_dwt2d_planes_impl.1} parent=0 // pred_fallthru
    _
  // Predicated region
  $region34: #{_dwt2d_planes_impl.1} parent=0 // pred_check
    _
  $region35: #{_dwt2d_planes_impl.1} parent=0 // pred_check_branch
    %54 = sbr.rel (0) target = $region37
  $region36: #{_dwt2d_planes_impl.1} parent=0 // pred_region
    _
  $region37: #{_dwt2d_planes_impl.1} parent=0 // pred_fallthru
    _
  // Predicated region
  $region38: #{_dwt2d_planes_impl.1} parent=0 // pred_check
    _
  $region39: #{_dwt2d_planes_impl.1} parent=0 // pred_check_branch
    %56 = sbr.rel (0) target = $region41
  $region40: #{_dwt2d_planes_impl.1} parent=0 // pred_region
    _
  $region41: #{_dwt2d_planes_impl.1} parent=0 // pred_fallthru
    _
  // Predicated region
  $region42: #{_dwt2d_planes_impl.1} parent=0 // pred_check
    _
  $region43: #{_dwt2d_planes_impl.1} parent=0 // pred_check_branch
    %58 = sbr.rel (0) target = $region45
  $region44: #{_dwt2d_planes_impl.1} parent=0 // pred_region
    _
  $region45: #{_dwt2d_planes_impl.1} parent=0 // pred_fallthru
    _
  // Predicated region
  $region46: #{_dwt2d_planes_impl.1} parent=0 // pred_check
    _
  $region47: #{_dwt2d_planes_impl.1} parent=0 // pred_check_branch
    %60 = sbr.rel (0) target = $region49
  $region48: #{_dwt2d_planes_impl.1} parent=0 // pred_region
    _
  $region49: #{_dwt2d_planes_impl.1} parent=0 // pred_fallthru
    _

</llo_original>
